<compile_context>
chip_gen: v7x
topology: tpu7x:2x2x1
jax: 0.10.0
libtpu: 0.0.40
codegen_flags: <defaults>
</compile_context>

<pallas_src>
import functools

import numpy as np
import jax
import jax.numpy as jnp
from jax.experimental import pallas as pl
from jax.experimental.pallas import tpu as pltpu

OUT_COLS = 110       # hard-coded in the PyTorch module: alpha = zeros((mx_len, 110))
NEG_INF = -1e9


def edge_att_kernel(len_ref, x_ref, w_ref, out_ref, *, wp, wf):
    b = pl.program_id(0)
    cur_len = len_ref[b]                      # int32 scalar from SMEM (scalar prefetch)
    x = x_ref[0]                              # (LK, Dp) zero-padded node features
    w = w_ref[...]                            # (Dp, Dp) zero-padded weight

    # scores[j, k] = x[j]^T W x[k]   -- two MXU matmuls, f32 accumulation,
    # contraction on the last axes of both operands (no explicit transpose).
    a = jnp.dot(x, w, preferred_element_type=jnp.float32)                    # (LK, Dp)
    scores = jax.lax.dot_general(a, x, (((1,), (1,)), ((), ())),
                                 preferred_element_type=jnp.float32)         # (LK, LK)

    L = scores.shape[0]
    j_ids = jax.lax.broadcasted_iota(jnp.int32, (L, L), 0)   # query position
    k_ids = jax.lax.broadcasted_iota(jnp.int32, (L, L), 1)   # key position
    lo = jnp.maximum(j_ids - wp, 0)
    hi = jnp.minimum(j_ids + wf, cur_len - 1)
    valid = (k_ids >= lo) & (k_ids <= hi) & (j_ids < cur_len)

    # Masked softmax over each row's window; fully-masked rows (j >= cur_len,
    # including the sequence padding) produce exact zeros.
    masked = jnp.where(valid, scores, NEG_INF)
    m = jnp.max(masked, axis=-1, keepdims=True)
    p = jnp.exp(masked - m) * valid.astype(jnp.float32)
    denom = jnp.sum(p, axis=-1, keepdims=True)
    denom = jnp.where(denom > 0.0, denom, 1.0)
    out_ref[0] = p * pl.reciprocal(denom)


def edge_att(node_features, text_len, weight, wp, wf):
    """Pallas implementation of EdgeAtt.forward (edge_idn is unused upstream)."""
    node_features = node_features.astype(jnp.float32)
    weight = weight.astype(jnp.float32)
    B, L, D = node_features.shape
    assert L <= OUT_COLS, "PyTorch EdgeAtt hard-codes a 110-wide output"

    LK = 128                                   # lane-dense padded sequence length
    Dp = ((D + 127) // 128) * 128              # MXU-width feature padding
    x_pad = jnp.zeros((B, LK, Dp), jnp.float32).at[:, :L, :D].set(node_features)
    w_pad = jnp.zeros((Dp, Dp), jnp.float32).at[:D, :D].set(weight)
    lens = text_len.astype(jnp.int32)

    kernel = functools.partial(edge_att_kernel, wp=int(wp), wf=int(wf))
    out = pl.pallas_call(
        kernel,
        out_shape=jax.ShapeDtypeStruct((B, LK, LK), jnp.float32),
        grid_spec=pltpu.PrefetchScalarGridSpec(
            num_scalar_prefetch=1,
            grid=(B,),
            in_specs=[
                pl.BlockSpec((1, LK, Dp), lambda b, lens: (b, 0, 0)),   # node features
                pl.BlockSpec((Dp, Dp), lambda b, lens: (0, 0)),         # weight (replicated)
            ],
            out_specs=pl.BlockSpec((1, LK, LK), lambda b, lens: (b, 0, 0)),
        ),
        compiler_params=pltpu.CompilerParams(dimension_semantics=("parallel",)),
    )(lens, x_pad, w_pad)

    # Slice the lane-dense (B, 128, 128) kernel output back to (B, mx_len, 110).
    return out[:, :L, :OUT_COLS]


# ---------------- reference (mirrors the PyTorch loops) for correctness -----
def edge_att_ref(node_features, text_len, weight, wp, wf):
    x = np.asarray(node_features, np.float32)
    lens = np.asarray(text_len)
    W = np.asarray(weight, np.float32)
    B, L, D = x.shape
    out = np.zeros((B, L, OUT_COLS), np.float32)
    att = x @ W.T                                # att[b, k] = W @ x[b, k]
    for i in range(B):
        cur = int(lens[i])
        for j in range(cur):
            s = max(j - wp, 0)
            e = min(j + wf, cur - 1)
            score = att[i, s:e + 1] @ x[i, j]
            score = score - score.max()
            pz = np.exp(score)
            out[i, j, s:e + 1] = pz / pz.sum()
    return out


if __name__ == "__main__":
    # Small config consistent with the module: input_dim=32, wp=2, wf=3,
    # batch=2, mx_len=12, variable sequence lengths.
    B, L, D = 2, 12, 32
    WP, WF = 2, 3

    key = jax.random.PRNGKey(0)
    kx, kw = jax.random.split(key)
    node_features = jax.random.normal(kx, (B, L, D), jnp.float32)
    # nn.Parameter init: normal_(0, var) with var = 2 / (D + D)  (std, per torch API)
    var = 2.0 / (D + D)
    weight = jax.random.normal(kw, (D, D), jnp.float32) * var
    text_len = jnp.array([12, 9], jnp.int32)
    # TODO(synk): edge_idn is accepted by the PyTorch forward but never used; omitted here.

    out = edge_att(node_features, text_len, weight, WP, WF)
    out = jax.block_until_ready(out)

    ref = edge_att_ref(node_features, text_len, weight, WP, WF)
    assert out.shape == (B, L, OUT_COLS)
    assert np.allclose(np.asarray(out), ref, atol=1e-4, rtol=1e-4), "mismatch vs reference"

    print("KERNEL_OK")
</pallas_src>

<mosaic_0001>
module attributes {stable_mosaic.version = 11 : i64} {
  func.func @edge_att_kernel(%arg0: i32, %arg1: memref<2xi32, #tpu.memory_space<smem>>, %arg2: memref<1x128x128xf32, #tpu.memory_space<vmem>>, %arg3: memref<128x128xf32, #tpu.memory_space<vmem>>, %arg4: memref<1x128x128xf32, #tpu.memory_space<vmem>>) attributes {dimension_semantics = [#tpu.dimension_semantics<parallel>], iteration_bounds = array<i64: 2>, scalar_prefetch = 1 : i64, scratch_operands = 0 : i64, tpu.core_type = #tpu.core_type<tc>, window_params = [{transform_indices = @transform_0, window_bounds = array<i64: 1, 128, 128>}, {pipeline_mode = #tpu.pipeline_mode<synchronous>, transform_indices = @transform_1, window_bounds = array<i64: 128, 128>}, {transform_indices = @transform_2, window_bounds = array<i64: 1, 128, 128>}]} {
    %0 = arith.index_cast %arg0 : i32 to index
    %1 = memref.load %arg1[%0] : memref<2xi32, #tpu.memory_space<smem>>
    %c0 = arith.constant 0 : index
    %c0_0 = arith.constant 0 : index
    %c0_1 = arith.constant 0 : index
    %2 = vector.load %arg2[%c0, %c0_0, %c0_1] : memref<1x128x128xf32, #tpu.memory_space<vmem>>, vector<1x128x128xf32>
    %3 = vector.shape_cast %2 : vector<1x128x128xf32> to vector<128x128xf32>
    %c0_2 = arith.constant 0 : index
    %c0_3 = arith.constant 0 : index
    %4 = vector.load %arg3[%c0_2, %c0_3] : memref<128x128xf32, #tpu.memory_space<vmem>>, vector<128x128xf32>
    %cst = arith.constant dense<0.000000e+00> : vector<128x128xf32>
    %5 = tpu.matmul %3, %4, %cst {dimension_numbers = #tpu.dot_dimension_numbers<[1], [0], [0], [1], [0, 0, 1, 1], [], []>} : vector<128x128xf32>, vector<128x128xf32>, vector<128x128xf32> -> vector<128x128xf32>
    %cst_4 = arith.constant dense<0.000000e+00> : vector<128x128xf32>
    %6 = tpu.matmul %5, %3, %cst_4 {dimension_numbers = #tpu.dot_dimension_numbers<[1], [1], [0], [0], [0, 0, 1, 0], [], []>} : vector<128x128xf32>, vector<128x128xf32>, vector<128x128xf32> -> vector<128x128xf32>
    %7 = tpu.iota {dimensions = array<i32: 0>} : vector<128x128xi32>
    %8 = tpu.iota {dimensions = array<i32: 1>} : vector<128x128xi32>
    %c2_i32 = arith.constant 2 : i32
    %9 = vector.broadcast %c2_i32 : i32 to vector<128x128xi32>
    %10 = arith.subi %7, %9 : vector<128x128xi32>
    %c0_i32 = arith.constant 0 : i32
    %11 = vector.broadcast %c0_i32 : i32 to vector<128x128xi32>
    %12 = arith.maxsi %10, %11 : vector<128x128xi32>
    %c3_i32 = arith.constant 3 : i32
    %13 = vector.broadcast %c3_i32 : i32 to vector<128x128xi32>
    %14 = arith.addi %7, %13 : vector<128x128xi32>
    %c1_i32 = arith.constant 1 : i32
    %15 = arith.subi %1, %c1_i32 : i32
    %16 = vector.broadcast %15 : i32 to vector<128x128xi32>
    %17 = arith.minsi %14, %16 : vector<128x128xi32>
    %18 = arith.cmpi sge, %8, %12 : vector<128x128xi32>
    %19 = arith.cmpi sle, %8, %17 : vector<128x128xi32>
    %20 = arith.andi %18, %19 : vector<128x128xi1>
    %21 = vector.broadcast %1 : i32 to vector<128x128xi32>
    %22 = arith.cmpi slt, %7, %21 : vector<128x128xi32>
    %23 = arith.andi %20, %22 : vector<128x128xi1>
    %cst_5 = arith.constant -1.000000e+09 : f32
    %24 = vector.broadcast %cst_5 : f32 to vector<128x128xf32>
    %25 = arith.select %23, %6, %24 : vector<128x128xi1>, vector<128x128xf32>
    %cst_6 = arith.constant dense<0xFF800000> : vector<128xf32>
    %26 = vector.multi_reduction <maximumf>, %25, %cst_6 [1] : vector<128x128xf32> to vector<128xf32>
    %27 = vector.shape_cast %26 : vector<128xf32> to vector<128x1xf32>
    %28 = vector.broadcast %27 : vector<128x1xf32> to vector<128x128xf32>
    %29 = arith.subf %25, %28 : vector<128x128xf32>
    %30 = math.exp %29 : vector<128x128xf32>
    %31 = arith.extui %23 : vector<128x128xi1> to vector<128x128xi32>
    %32 = arith.sitofp %31 : vector<128x128xi32> to vector<128x128xf32>
    %33 = arith.mulf %30, %32 : vector<128x128xf32>
    %cst_7 = arith.constant dense<0.000000e+00> : vector<128xf32>
    %34 = vector.multi_reduction <add>, %33, %cst_7 [1] : vector<128x128xf32> to vector<128xf32>
    %35 = vector.shape_cast %34 : vector<128xf32> to vector<128x1xf32>
    %cst_8 = arith.constant 0.000000e+00 : f32
    %36 = vector.broadcast %cst_8 : f32 to vector<128x1xf32>
    %37 = arith.cmpf ogt, %35, %36 : vector<128x1xf32>
    %cst_9 = arith.constant 1.000000e+00 : f32
    %38 = vector.broadcast %cst_9 : f32 to vector<128x1xf32>
    %39 = arith.select %37, %35, %38 : vector<128x1xi1>, vector<128x1xf32>
    %40 = tpu.reciprocal %39 : vector<128x1xf32> -> vector<128x1xf32>
    %41 = vector.broadcast %40 : vector<128x1xf32> to vector<128x128xf32>
    %42 = arith.mulf %33, %41 : vector<128x128xf32>
    %c0_10 = arith.constant 0 : index
    %c0_11 = arith.constant 0 : index
    %c0_12 = arith.constant 0 : index
    %43 = vector.load %arg4[%c0_10, %c0_11, %c0_12] : memref<1x128x128xf32, #tpu.memory_space<vmem>>, vector<1x128x128xf32>
    %44 = vector.shape_cast %43 : vector<1x128x128xf32> to vector<128x128xf32>
    %45 = vector.shape_cast %42 : vector<128x128xf32> to vector<1x128x128xf32>
    tpu.vector_store %arg4[%c0_10, %c0_11, %c0_12], %45 {strides = array<i32>} : memref<1x128x128xf32, #tpu.memory_space<vmem>>, vector<1x128x128xf32>,
    return
  }
  func.func @transform_0(%arg0: i32, %arg1: memref<2xi32, #tpu.memory_space<smem>>) -> (i32, i32, i32) {
    %c0_i32 = arith.constant 0 : i32
    %c0_i32_0 = arith.constant 0 : i32
    %c0_i32_1 = arith.constant 0 : i32
    return %arg0, %c0_i32, %c0_i32_0 : i32, i32, i32
  }
  func.func @transform_1(%arg0: i32, %arg1: memref<2xi32, #tpu.memory_space<smem>>) -> (i32, i32) {
    %c0_i32 = arith.constant 0 : i32
    %c0_i32_0 = arith.constant 0 : i32
    %c0_i32_1 = arith.constant 0 : i32
    return %c0_i32, %c0_i32_0 : i32, i32
  }
  func.func @transform_2(%arg0: i32, %arg1: memref<2xi32, #tpu.memory_space<smem>>) -> (i32, i32, i32) {
    %c0_i32 = arith.constant 0 : i32
    %c0_i32_0 = arith.constant 0 : i32
    %c0_i32_1 = arith.constant 0 : i32
    return %arg0, %c0_i32, %c0_i32_0 : i32, i32, i32
  }
}

</mosaic_0001>

<llo_original>
// kernel: tpu_custom_call.1
$region0: #{tpu_custom_call.1}
  #allocation0 [shape = 'u32[]', space=smem, size = 0x4, offset = 0x4, fixed_abs, tag = 'smem constant byte address 0x4 - core index']
  #allocation1 [shape = 'u32[144,128]{1,0:T(1,128)}', space=vmem, size = 0x12000, scoped, tag = 'internal scratch']
  #allocation2 [shape = 's32[1]{0}', space=sflag, size = 0x4, scoped, tag = 'scoped memory for tpu_custom_call.1']
  #allocation3 [shape = 'u8[512]{0}', space=smem, size = 0x200, scoped, tag = 'prefetched SMEM operand 0']
  %s0 = inlined_call_operand.hbm [shape: s32[2], index: 0, kind: input, shape index: {}]
  %s1 = inlined_call_operand.hbm [shape: f32[2,128,128], index: 1, kind: input, shape index: {}]
  %s2 = inlined_call_operand.hbm [shape: f32[128,128], index: 2, kind: input, shape index: {}]
  %s3 = inlined_call_operand.hbm [shape: f32[2,128,128], index: 3, kind: output, shape index: {}]
  %s4 = sld [smem:[#allocation0]]
  $region49: #{tpu_custom_call.1} parent=0
    _
  %s6 = ssub.s32 1, %s4
  %s7 = scalar_select 0, %s6, %s4
  %9 = dma.hbm_to_smem %s0, 16, [#allocation3], [#allocation2]
  %10 = dma.done [#allocation2], 16
  %11 = sfence
  $region1: #{tpu_custom_call.1} parent=0
    #allocation4 [shape = 'u8[131072]{0}', space=vmem, size = 0x20000, scoped, tag = 'input window, operand 1']
    #allocation5 [shape = 's32[2]{0}', space=sflag, size = 0x8, scoped, tag = 'scoped memory for tpu_custom_call.1']
    #allocation6 [shape = 's32[2]{0}', space=sflag, size = 0x8, scoped, tag = 'scoped memory for tpu_custom_call.1']
    #allocation7 [shape = 'u8[65536]{0}', space=vmem, size = 0x10000, scoped, tag = 'input window, operand 2, single buffered']
    #allocation8 [shape = 's32[1]{0}', space=sflag, size = 0x4, scoped, tag = 'scoped memory for tpu_custom_call.1']
    #allocation9 [shape = 'u8[131072]{0}', space=vmem, size = 0x20000, scoped, tag = 'output window, operand 0']
    %12 = vsyncpa [#allocation5], 0
    %s13 = scalar_lea.sflag [#allocation5], 1
    %14 = vsyncpa %s13, 0
    %15 = vsyncpa [#allocation8], 0
    %16 = vsyncpa [#allocation6], 0
    %s17 = scalar_lea.sflag [#allocation6], 1
    %18 = vsyncpa %s17, 0
    loop: start=0, step=1, limit=4
    $region2: #{tpu_custom_call.1} parent=1 // loop_pre_header
      _
    $region3: #{tpu_custom_call.1} parent=1 // loop_header
      %s20 = sphi 0, %s24
      %p21 = scmp.ge.s32.totalorder %s20, 4
      %s30 = sphi 0, %s32
      %s33 = sphi 0, %s30
      %s34 = sphi 0, %s33
      %s50 = sphi 0, %s34
      %s54 = sphi 0, %s54
      %s56 = sphi 0, %s54
      %s57 = sphi 0, %s56
      %s71 = sphi 0, %s57
      %s77 = sphi 0, %s79
      %s80 = sphi 0, %s77
      %s81 = sphi 0, %s80
      %s97 = sphi 0, %s81
    $region4: #{tpu_custom_call.1} parent=1 // loop_header_branch
      %23 = sbr.rel (%p21) target = $region8
    $region5: #{tpu_custom_call.1} parent=1 // loop_body
      %s25 = ssub.s32 %s20, 1
      %s26 = ssub.s32 %s20, 2
      %s27 = sadd.s32 %s20, 1
      %s28 = ssub.s32 %s20, %s27
      %p29 = scmp.eq.s32.totalorder %s28, 0
      %s31 = sadd.s32 %s30, 1
      %s32 = scalar_select %p29, %s30, %s31
      %p35 = pneg %p29
      %p36 = scmp.eq.s32.totalorder %s20, 1
      %p37 = por %p35, %p36
      %p38 = scmp.ne.s32.totalorder %s30, %s33
      %p39 = scmp.eq.s32.totalorder %s20, 0
      %p40 = por %p38, %p39
      %p41 = scmp.ne.s32.totalorder %s30, %s33
      %p42 = scmp.eq.s32.totalorder %s25, 1
      %p43 = por %p41, %p42
      %p44 = scmp.ne.s32.totalorder %s33, %s34
      %p45 = scmp.eq.s32.totalorder %s25, 0
      %p46 = por %p44, %p45
      %p47 = scmp.ne.s32.totalorder %s33, %s34
      %p48 = scmp.eq.s32.totalorder %s26, 1
      %p49 = por %p47, %p48
      %p51 = scmp.ne.s32.totalorder %s34, %s50
      %p52 = scmp.eq.s32.totalorder %s26, 0
      %p53 = por %p51, %p52
      %s55 = sadd.s32 %s54, 1
      %p58 = scmp.eq.s32.totalorder %s20, 1
      %p59 = scmp.ne.s32.totalorder %s54, %s56
      %p60 = scmp.eq.s32.totalorder %s20, 0
      %p61 = por %p59, %p60
      %p62 = scmp.ne.s32.totalorder %s54, %s56
      %p63 = scmp.eq.s32.totalorder %s25, 1
      %p64 = por %p62, %p63
      %p65 = scmp.ne.s32.totalorder %s56, %s57
      %p66 = scmp.eq.s32.totalorder %s25, 0
      %p67 = por %p65, %p66
      %p68 = scmp.ne.s32.totalorder %s56, %s57
      %p69 = scmp.eq.s32.totalorder %s26, 1
      %p70 = por %p68, %p69
      %p72 = scmp.ne.s32.totalorder %s57, %s71
      %p73 = scmp.eq.s32.totalorder %s26, 0
      %p74 = por %p72, %p73
      %s75 = ssub.s32 %s20, %s27
      %p76 = scmp.eq.s32.totalorder %s75, 0
      %s78 = sadd.s32 %s77, 1
      %s79 = scalar_select %p76, %s77, %s78
      %p82 = pneg %p76
      %p83 = scmp.eq.s32.totalorder %s20, 1
      %p84 = por %p82, %p83
      %p85 = scmp.ne.s32.totalorder %s77, %s80
      %p86 = scmp.eq.s32.totalorder %s20, 0
      %p87 = por %p85, %p86
      %p88 = scmp.ne.s32.totalorder %s77, %s80
      %p89 = scmp.eq.s32.totalorder %s25, 1
      %p90 = por %p88, %p89
      %p91 = scmp.ne.s32.totalorder %s80, %s81
      %p92 = scmp.eq.s32.totalorder %s25, 0
      %p93 = por %p91, %p92
      %p94 = scmp.ne.s32.totalorder %s80, %s81
      %p95 = scmp.eq.s32.totalorder %s26, 1
      %p96 = por %p94, %p95
      %p98 = scmp.ne.s32.totalorder %s81, %s97
      %p99 = scmp.eq.s32.totalorder %s26, 0
      %p100 = por %p98, %p99
      %p101 = scmp.le.s32.totalorder 1, %s20
      %p102 = scmp.lt.s32.totalorder %s20, 3
      %p103 = pnand %p101, %p102
      %p104 = pneg %p103
      // Predicated region
      $region9: #{tpu_custom_call.1} parent=5 // pred_check
        _
      $region10: #{tpu_custom_call.1} parent=5 // pred_check_branch
        %106 = sbr.rel (%p103) target = $region12
      $region11: #{tpu_custom_call.1} parent=5 // pred_region
        %s107 = ssub.s32 %s20, 1
        // Predicated region
        $region13: #{tpu_custom_call.1} parent=11 // pred_check
          %p108 = pneg %p67
        $region14: #{tpu_custom_call.1} parent=11 // pred_check_branch
          %110 = sbr.rel (%p108) target = $region16
        $region15: #{tpu_custom_call.1} parent=11 // pred_region
          %s112 = ssub.s32 2048, 2048
          %113 = vsyncadd [#allocation8], %s112
          %s114 = sshll.u32 [#allocation7], 4
          %s115 = int_to_ptr.vmem [resolvable:$true] %s114
          %120 = dma.hbm_to_vmem [thread:$0]  %s2, 2048, %s115, [#allocation8], 128, 128, 8
        $region16: #{tpu_custom_call.1} parent=11 // pred_fallthru
          _
      $region12: #{tpu_custom_call.1} parent=5 // pred_fallthru
        _
      %p121 = scmp.lt.s32.totalorder %s20, 2
      // Predicated region
      $region17: #{tpu_custom_call.1} parent=5 // pred_check
        %p122 = pneg %p121
      $region18: #{tpu_custom_call.1} parent=5 // pred_check_branch
        %124 = sbr.rel (%p122) target = $region20
      $region19: #{tpu_custom_call.1} parent=5 // pred_region
        // Predicated region
        $region21: #{tpu_custom_call.1} parent=19 // pred_check
          %p125 = pneg %p40
        $region22: #{tpu_custom_call.1} parent=19 // pred_check_branch
          %127 = sbr.rel (%p125) target = $region24
        $region23: #{tpu_custom_call.1} parent=19 // pred_region
          %s128 = sand.u32 %s30, 1
          %s129 = scalar_lea.sflag [#allocation5], %s128
          %s130 = sand.u32 %s30, 1
          %s131 = smul.addr %s130, 128
          %s132 = scalar_lea.vmem [#allocation4], %s131
          %s134 = ssub.s32 2048, 2048
          %135 = vsyncadd %s129, %s134
          %s136 = smul.addr %s20, 16
          %s137 = smul.addr %s136, 128
          %s138 = scalar_lea.hbm %s1, %s137
          %s139 = sshll.u32 %s132, 4
          %s140 = int_to_ptr.vmem [resolvable:$true] %s139
          %145 = dma.hbm_to_vmem [thread:$0]  %s138, 2048, %s140, %s129, 128, 128, 8
        $region24: #{tpu_custom_call.1} parent=19 // pred_fallthru
          _
      $region20: #{tpu_custom_call.1} parent=5 // pred_fallthru
        _
      %p146 = scmp.le.s32.totalorder 1, %s20
      %p147 = scmp.lt.s32.totalorder %s20, 3
      %p148 = pnand %p146, %p147
      %p149 = pneg %p148
      // Predicated region
      $region25: #{tpu_custom_call.1} parent=5 // pred_check
        _
      $region26: #{tpu_custom_call.1} parent=5 // pred_check_branch
        %151 = sbr.rel (%p148) target = $region28
      $region27: #{tpu_custom_call.1} parent=5 // pred_region
        %s152 = ssub.s32 %s20, 1
        %s153 = sand.u32 %s33, 1
        %s154 = scalar_lea.sflag [#allocation5], %s153
        %s155 = sand.u32 %s33, 1
        %s156 = smul.addr %s155, 128
        %s157 = scalar_lea.vmem [#allocation4], %s156
        // Predicated region
        $region29: #{tpu_custom_call.1} parent=27 // pred_check
          %p158 = pneg %p46
        $region30: #{tpu_custom_call.1} parent=27 // pred_check_branch
          %160 = sbr.rel (%p158) target = $region32
        $region31: #{tpu_custom_call.1} parent=27 // pred_region
          %161 = dma.done %s154, 2048
        $region32: #{tpu_custom_call.1} parent=27 // pred_fallthru
          _
        // Predicated region
        $region33: #{tpu_custom_call.1} parent=27 // pred_check
          %p162 = pneg %p67
        $region34: #{tpu_custom_call.1} parent=27 // pred_check_branch
          %164 = sbr.rel (%p162) target = $region36
        $region35: #{tpu_custom_call.1} parent=27 // pred_region
          %165 = dma.done [#allocation8], 2048
        $region36: #{tpu_custom_call.1} parent=27 // pred_fallthru
          _
        %s166 = sand.u32 %s33, 1
        %s167 = scalar_lea.sflag [#allocation5], %s166
        %s168 = sand.u32 %s33, 1
        %s169 = smul.addr %s168, 128
        %s170 = scalar_lea.vmem [#allocation4], %s169
        %p171 = pneg %p46
        %p172 = pneg %p43
        %p173 = pneg %p67
        %p174 = pneg %p64
        %p175 = pneg %p93
        %p176 = pneg %p90
        %s177 = sand.u32 %s80, 1
        %s178 = scalar_lea.sflag [#allocation6], %s177
        %s179 = sand.u32 %s80, 1
        %s180 = smul.addr %s179, 128
        %s181 = scalar_lea.vmem [#allocation9], %s180
        %s182 = sld [smem:[#allocation3 + %s25]]
        %v183 = vld [vmem:[%s157] sm:$0xff]
        %v184 = vld [vmem:[%s157 + $0x8] sm:$0xff]
        %v185 = vld [vmem:[%s157 + $0x10] sm:$0xff]
        %v186 = vld [vmem:[%s157 + $0x18] sm:$0xff]
        %v187 = vld [vmem:[%s157 + $0x20] sm:$0xff]
        %v188 = vld [vmem:[%s157 + $0x28] sm:$0xff]
        %v189 = vld [vmem:[%s157 + $0x30] sm:$0xff]
        %v190 = vld [vmem:[%s157 + $0x38] sm:$0xff]
        %v191 = vld [vmem:[%s157 + $0x40] sm:$0xff]
        %v192 = vld [vmem:[%s157 + $0x48] sm:$0xff]
        %v193 = vld [vmem:[%s157 + $0x50] sm:$0xff]
        %v194 = vld [vmem:[%s157 + $0x58] sm:$0xff]
        %v195 = vld [vmem:[%s157 + $0x60] sm:$0xff]
        %v196 = vld [vmem:[%s157 + $0x68] sm:$0xff]
        %v197 = vld [vmem:[%s157 + $0x70] sm:$0xff]
        %v198 = vld [vmem:[%s157 + $0x78] sm:$0xff]
        %v199 = vld [vmem:[#allocation7] sm:$0xff]
        %v200 = vld [vmem:[#allocation7 + $0x8] sm:$0xff]
        %v201 = vld [vmem:[#allocation7 + $0x10] sm:$0xff]
        %v202 = vld [vmem:[#allocation7 + $0x18] sm:$0xff]
        %v203 = vld [vmem:[#allocation7 + $0x20] sm:$0xff]
        %v204 = vld [vmem:[#allocation7 + $0x28] sm:$0xff]
        %v205 = vld [vmem:[#allocation7 + $0x30] sm:$0xff]
        %v206 = vld [vmem:[#allocation7 + $0x38] sm:$0xff]
        %v207 = vld [vmem:[#allocation7 + $0x40] sm:$0xff]
        %v208 = vld [vmem:[#allocation7 + $0x48] sm:$0xff]
        %v209 = vld [vmem:[#allocation7 + $0x50] sm:$0xff]
        %v210 = vld [vmem:[#allocation7 + $0x58] sm:$0xff]
        %v211 = vld [vmem:[#allocation7 + $0x60] sm:$0xff]
        %v212 = vld [vmem:[#allocation7 + $0x68] sm:$0xff]
        %v213 = vld [vmem:[#allocation7 + $0x70] sm:$0xff]
        %v214 = vld [vmem:[#allocation7 + $0x78] sm:$0xff]
        %215 = vmatprep.subr.mxu0 0.0
        %216 = vmatpush1.msra.mxu0 %v199
        %217 = vmatprep.subr.mxu0 0.0
        %218 = vmatpush1.msra.mxu0 %v200
        %219 = vmatprep.subr.mxu0 0.0
        %220 = vmatpush1.msra.mxu0 %v201
        %221 = vmatprep.subr.mxu0 0.0
        %222 = vmatpush1.msra.mxu0 %v202
        %223 = vmatprep.subr.mxu0 0.0
        %224 = vmatpush1.msra.mxu0 %v203
        %225 = vmatprep.subr.mxu0 0.0
        %226 = vmatpush1.msra.mxu0 %v204
        %227 = vmatprep.subr.mxu0 0.0
        %228 = vmatpush1.msra.mxu0 %v205
        %229 = vmatprep.subr.mxu0 0.0
        %230 = vmatpush1.msra.mxu0 %v206
        %231 = vmatprep.subr.mxu0 0.0
        %232 = vmatpush1.msra.mxu0 %v207
        %233 = vmatprep.subr.mxu0 0.0
        %234 = vmatpush1.msra.mxu0 %v208
        %235 = vmatprep.subr.mxu0 0.0
        %236 = vmatpush1.msra.mxu0 %v209
        %237 = vmatprep.subr.mxu0 0.0
        %238 = vmatpush1.msra.mxu0 %v210
        %239 = vmatprep.subr.mxu0 0.0
        %240 = vmatpush1.msra.mxu0 %v211
        %241 = vmatprep.subr.mxu0 0.0
        %242 = vmatpush1.msra.mxu0 %v212
        %243 = vmatprep.subr.mxu0 0.0
        %244 = vmatpush1.msra.mxu0 %v213
        %245 = vmatprep.subr.mxu0 0.0
        %246 = vmatpush1.msra.mxu0 %v214
        %247 = vmatprep.subr.mxu0 0.0
        %248 = vmatpush1.msra.mxu0 0.0
        %249 = vmatprep.subr.mxu0 0.0
        %250 = vmatpush1.msra.mxu0 0.0
        %251 = vmatprep.subr.mxu0 0.0
        %252 = vmatpush1.msra.mxu0 0.0
        %253 = vmatprep.subr.mxu0 0.0
        %254 = vmatpush1.msra.mxu0 0.0
        %255 = vmatprep.subr.mxu0 0.0
        %256 = vmatpush1.msra.mxu0 0.0
        %257 = vmatprep.subr.mxu0 0.0
        %258 = vmatpush1.msra.mxu0 0.0
        %259 = vmatprep.subr.mxu0 0.0
        %260 = vmatpush1.msra.mxu0 0.0
        %261 = vmatprep.subr.mxu0 0.0
        %262 = vmatpush1.msra.mxu0 0.0
        %263 = vmatprep.subr.mxu0 0.0
        %264 = vmatpush1.msra.mxu0 0.0
        %265 = vmatprep.subr.mxu0 0.0
        %266 = vmatpush1.msra.mxu0 0.0
        %267 = vmatprep.subr.mxu0 0.0
        %268 = vmatpush1.msra.mxu0 0.0
        %269 = vmatprep.subr.mxu0 0.0
        %270 = vmatpush1.msra.mxu0 0.0
        %271 = vmatprep.subr.mxu0 0.0
        %272 = vmatpush1.msra.mxu0 0.0
        %273 = vmatprep.subr.mxu0 0.0
        %274 = vmatpush1.msra.mxu0 0.0
        %275 = vmatprep.subr.mxu0 0.0
        %276 = vmatpush1.msra.mxu0 0.0
        %277 = vmatprep.subr.mxu0 0.0
        %278 = vmatpush1.msra.mxu0 0.0
        %279 = vmatprep.mubr.f32.mxu0 0.0
        %280 = vmatmul.mubr.f32.gmra.mrb[0].mxu0 %v183
        %v281 = vpop.f32.mrb[0].mxu0
        %v282 = vadd.f32 0.0, %v281
        %v283 = vpop.f32.mrb[0].mxu0
        %284 = vmatprep.mubr.f32.mxu0 0.0
        %285 = vmatmul.mubr.f32.gmra.mrb[0].mxu0 %v184
        %v286 = vpop.f32.mrb[0].mxu0
        %v287 = vadd.f32 0.0, %v286
        %v288 = vpop.f32.mrb[0].mxu0
        %289 = vmatprep.mubr.f32.mxu0 0.0
        %290 = vmatmul.mubr.f32.gmra.mrb[0].mxu0 %v185
        %v291 = vpop.f32.mrb[0].mxu0
        %v292 = vadd.f32 0.0, %v291
        %v293 = vpop.f32.mrb[0].mxu0
        %294 = vmatprep.mubr.f32.mxu0 0.0
        %295 = vmatmul.mubr.f32.gmra.mrb[0].mxu0 %v186
        %v296 = vpop.f32.mrb[0].mxu0
        %v297 = vadd.f32 0.0, %v296
        %v298 = vpop.f32.mrb[0].mxu0
        %299 = vmatprep.mubr.f32.mxu0 0.0
        %300 = vmatmul.mubr.f32.gmra.mrb[0].mxu0 %v187
        %v301 = vpop.f32.mrb[0].mxu0
        %v302 = vadd.f32 0.0, %v301
        %v303 = vpop.f32.mrb[0].mxu0
        %304 = vmatprep.mubr.f32.mxu0 0.0
        %305 = vmatmul.mubr.f32.gmra.mrb[0].mxu0 %v188
        %v306 = vpop.f32.mrb[0].mxu0
        %v307 = vadd.f32 0.0, %v306
        %v308 = vpop.f32.mrb[0].mxu0
        %309 = vmatprep.mubr.f32.mxu0 0.0
        %310 = vmatmul.mubr.f32.gmra.mrb[0].mxu0 %v189
        %v311 = vpop.f32.mrb[0].mxu0
        %v312 = vadd.f32 0.0, %v311
        %v313 = vpop.f32.mrb[0].mxu0
        %314 = vmatprep.mubr.f32.mxu0 0.0
        %315 = vmatmul.mubr.f32.gmra.mrb[0].mxu0 %v190
        %v316 = vpop.f32.mrb[0].mxu0
        %v317 = vadd.f32 0.0, %v316
        %v318 = vpop.f32.mrb[0].mxu0
        %319 = vmatprep.mubr.f32.mxu0 0.0
        %320 = vmatmul.mubr.f32.gmra.mrb[0].mxu0 %v191
        %v321 = vpop.f32.mrb[0].mxu0
        %v322 = vadd.f32 0.0, %v321
        %v323 = vpop.f32.mrb[0].mxu0
        %324 = vmatprep.mubr.f32.mxu0 0.0
        %325 = vmatmul.mubr.f32.gmra.mrb[0].mxu0 %v192
        %v326 = vpop.f32.mrb[0].mxu0
        %v327 = vadd.f32 0.0, %v326
        %v328 = vpop.f32.mrb[0].mxu0
        %329 = vmatprep.mubr.f32.mxu0 0.0
        %330 = vmatmul.mubr.f32.gmra.mrb[0].mxu0 %v193
        %v331 = vpop.f32.mrb[0].mxu0
        %v332 = vadd.f32 0.0, %v331
        %v333 = vpop.f32.mrb[0].mxu0
        %334 = vmatprep.mubr.f32.mxu0 0.0
        %335 = vmatmul.mubr.f32.gmra.mrb[0].mxu0 %v194
        %v336 = vpop.f32.mrb[0].mxu0
        %v337 = vadd.f32 0.0, %v336
        %v338 = vpop.f32.mrb[0].mxu0
        %339 = vmatprep.mubr.f32.mxu0 0.0
        %340 = vmatmul.mubr.f32.gmra.mrb[0].mxu0 %v195
        %v341 = vpop.f32.mrb[0].mxu0
        %v342 = vadd.f32 0.0, %v341
        %v343 = vpop.f32.mrb[0].mxu0
        %344 = vmatprep.mubr.f32.mxu0 0.0
        %345 = vmatmul.mubr.f32.gmra.mrb[0].mxu0 %v196
        %v346 = vpop.f32.mrb[0].mxu0
        %v347 = vadd.f32 0.0, %v346
        %v348 = vpop.f32.mrb[0].mxu0
        %349 = vmatprep.mubr.f32.mxu0 0.0
        %350 = vmatmul.mubr.f32.gmra.mrb[0].mxu0 %v197
        %v351 = vpop.f32.mrb[0].mxu0
        %v352 = vadd.f32 0.0, %v351
        %v353 = vpop.f32.mrb[0].mxu0
        %354 = vmatprep.mubr.f32.mxu0 0.0
        %355 = vmatmul.mubr.f32.gmra.mrb[0].mxu0 %v198
        %v356 = vpop.f32.mrb[0].mxu0
        %v357 = vadd.f32 0.0, %v356
        %v358 = vpop.f32.mrb[0].mxu0
        %359 = vdwg.mxu0
        %360 = vmatprep.subr.mxu0 0.0
        %361 = vmatpush1.xpose.msra.mxu0 %v183
        %362 = vmatprep.subr.mxu0 0.0
        %363 = vmatpush1.xpose.msra.mxu0 %v184
        %364 = vmatprep.subr.mxu0 0.0
        %365 = vmatpush1.xpose.msra.mxu0 %v185
        %366 = vmatprep.subr.mxu0 0.0
        %367 = vmatpush1.xpose.msra.mxu0 %v186
        %368 = vmatprep.subr.mxu0 0.0
        %369 = vmatpush1.xpose.msra.mxu0 %v187
        %370 = vmatprep.subr.mxu0 0.0
        %371 = vmatpush1.xpose.msra.mxu0 %v188
        %372 = vmatprep.subr.mxu0 0.0
        %373 = vmatpush1.xpose.msra.mxu0 %v189
        %374 = vmatprep.subr.mxu0 0.0
        %375 = vmatpush1.xpose.msra.mxu0 %v190
        %376 = vmatprep.subr.mxu0 0.0
        %377 = vmatpush1.xpose.msra.mxu0 %v191
        %378 = vmatprep.subr.mxu0 0.0
        %379 = vmatpush1.xpose.msra.mxu0 %v192
        %380 = vmatprep.subr.mxu0 0.0
        %381 = vmatpush1.xpose.msra.mxu0 %v193
        %382 = vmatprep.subr.mxu0 0.0
        %383 = vmatpush1.xpose.msra.mxu0 %v194
        %384 = vmatprep.subr.mxu0 0.0
        %385 = vmatpush1.xpose.msra.mxu0 %v195
        %386 = vmatprep.subr.mxu0 0.0
        %387 = vmatpush1.xpose.msra.mxu0 %v196
        %388 = vmatprep.subr.mxu0 0.0
        %389 = vmatpush1.xpose.msra.mxu0 %v197
        %390 = vmatprep.subr.mxu0 0.0
        %391 = vmatpush1.xpose.msra.mxu0 %v198
        %392 = vmatprep.subr.mxu0 0.0
        %393 = vmatpush1.xpose.msra.mxu0 0.0
        %394 = vmatprep.subr.mxu0 0.0
        %395 = vmatpush1.xpose.msra.mxu0 0.0
        %396 = vmatprep.subr.mxu0 0.0
        %397 = vmatpush1.xpose.msra.mxu0 0.0
        %398 = vmatprep.subr.mxu0 0.0
        %399 = vmatpush1.xpose.msra.mxu0 0.0
        %400 = vmatprep.subr.mxu0 0.0
        %401 = vmatpush1.xpose.msra.mxu0 0.0
        %402 = vmatprep.subr.mxu0 0.0
        %403 = vmatpush1.xpose.msra.mxu0 0.0
        %404 = vmatprep.subr.mxu0 0.0
        %405 = vmatpush1.xpose.msra.mxu0 0.0
        %406 = vmatprep.subr.mxu0 0.0
        %407 = vmatpush1.xpose.msra.mxu0 0.0
        %408 = vmatprep.subr.mxu0 0.0
        %409 = vmatpush1.xpose.msra.mxu0 0.0
        %410 = vmatprep.subr.mxu0 0.0
        %411 = vmatpush1.xpose.msra.mxu0 0.0
        %412 = vmatprep.subr.mxu0 0.0
        %413 = vmatpush1.xpose.msra.mxu0 0.0
        %414 = vmatprep.subr.mxu0 0.0
        %415 = vmatpush1.xpose.msra.mxu0 0.0
        %416 = vmatprep.subr.mxu0 0.0
        %417 = vmatpush1.xpose.msra.mxu0 0.0
        %418 = vmatprep.subr.mxu0 0.0
        %419 = vmatpush1.xpose.msra.mxu0 0.0
        %420 = vmatprep.subr.mxu0 0.0
        %421 = vmatpush1.xpose.msra.mxu0 0.0
        %422 = vmatprep.subr.mxu0 0.0
        %423 = vmatpush1.xpose.msra.mxu0 0.0
        %424 = vmatprep.mubr.f32.mxu0 0.0
        %425 = vmatmul.mubr.f32.gmra.mrb[0].mxu0 %v282
        %v426 = vpop.f32.mrb[0].mxu0
        %v427 = vadd.f32 0.0, %v426
        %v428 = vpop.f32.mrb[0].mxu0
        %429 = vmatprep.mubr.f32.mxu0 0.0
        %430 = vmatmul.mubr.f32.gmra.mrb[0].mxu0 %v287
        %v431 = vpop.f32.mrb[0].mxu0
        %v432 = vadd.f32 0.0, %v431
        %v433 = vpop.f32.mrb[0].mxu0
        %434 = vmatprep.mubr.f32.mxu0 0.0
        %435 = vmatmul.mubr.f32.gmra.mrb[0].mxu0 %v292
        %v436 = vpop.f32.mrb[0].mxu0
        %v437 = vadd.f32 0.0, %v436
        %v438 = vpop.f32.mrb[0].mxu0
        %439 = vmatprep.mubr.f32.mxu0 0.0
        %440 = vmatmul.mubr.f32.gmra.mrb[0].mxu0 %v297
        %v441 = vpop.f32.mrb[0].mxu0
        %v442 = vadd.f32 0.0, %v441
        %v443 = vpop.f32.mrb[0].mxu0
        %444 = vmatprep.mubr.f32.mxu0 0.0
        %445 = vmatmul.mubr.f32.gmra.mrb[0].mxu0 %v302
        %v446 = vpop.f32.mrb[0].mxu0
        %v447 = vadd.f32 0.0, %v446
        %v448 = vpop.f32.mrb[0].mxu0
        %449 = vmatprep.mubr.f32.mxu0 0.0
        %450 = vmatmul.mubr.f32.gmra.mrb[0].mxu0 %v307
        %v451 = vpop.f32.mrb[0].mxu0
        %v452 = vadd.f32 0.0, %v451
        %v453 = vpop.f32.mrb[0].mxu0
        %454 = vmatprep.mubr.f32.mxu0 0.0
        %455 = vmatmul.mubr.f32.gmra.mrb[0].mxu0 %v312
        %v456 = vpop.f32.mrb[0].mxu0
        %v457 = vadd.f32 0.0, %v456
        %v458 = vpop.f32.mrb[0].mxu0
        %459 = vmatprep.mubr.f32.mxu0 0.0
        %460 = vmatmul.mubr.f32.gmra.mrb[0].mxu0 %v317
        %v461 = vpop.f32.mrb[0].mxu0
        %v462 = vadd.f32 0.0, %v461
        %v463 = vpop.f32.mrb[0].mxu0
        %464 = vmatprep.mubr.f32.mxu0 0.0
        %465 = vmatmul.mubr.f32.gmra.mrb[0].mxu0 %v322
        %v466 = vpop.f32.mrb[0].mxu0
        %v467 = vadd.f32 0.0, %v466
        %v468 = vpop.f32.mrb[0].mxu0
        %469 = vmatprep.mubr.f32.mxu0 0.0
        %470 = vmatmul.mubr.f32.gmra.mrb[0].mxu0 %v327
        %v471 = vpop.f32.mrb[0].mxu0
        %v472 = vadd.f32 0.0, %v471
        %v473 = vpop.f32.mrb[0].mxu0
        %474 = vmatprep.mubr.f32.mxu0 0.0
        %475 = vmatmul.mubr.f32.gmra.mrb[0].mxu0 %v332
        %v476 = vpop.f32.mrb[0].mxu0
        %v477 = vadd.f32 0.0, %v476
        %v478 = vpop.f32.mrb[0].mxu0
        %479 = vmatprep.mubr.f32.mxu0 0.0
        %480 = vmatmul.mubr.f32.gmra.mrb[0].mxu0 %v337
        %v481 = vpop.f32.mrb[0].mxu0
        %v482 = vadd.f32 0.0, %v481
        %v483 = vpop.f32.mrb[0].mxu0
        %484 = vmatprep.mubr.f32.mxu0 0.0
        %485 = vmatmul.mubr.f32.gmra.mrb[0].mxu0 %v342
        %v486 = vpop.f32.mrb[0].mxu0
        %v487 = vadd.f32 0.0, %v486
        %v488 = vpop.f32.mrb[0].mxu0
        %489 = vmatprep.mubr.f32.mxu0 0.0
        %490 = vmatmul.mubr.f32.gmra.mrb[0].mxu0 %v347
        %v491 = vpop.f32.mrb[0].mxu0
        %v492 = vadd.f32 0.0, %v491
        %v493 = vpop.f32.mrb[0].mxu0
        %494 = vmatprep.mubr.f32.mxu0 0.0
        %495 = vmatmul.mubr.f32.gmra.mrb[0].mxu0 %v352
        %v496 = vpop.f32.mrb[0].mxu0
        %v497 = vadd.f32 0.0, %v496
        %v498 = vpop.f32.mrb[0].mxu0
        %499 = vmatprep.mubr.f32.mxu0 0.0
        %500 = vmatmul.mubr.f32.gmra.mrb[0].mxu0 %v357
        %v501 = vpop.f32.mrb[0].mxu0
        %v502 = vadd.f32 0.0, %v501
        %v503 = vpop.f32.mrb[0].mxu0
        %504 = vdwg.mxu0
        %v505 = vlaneseq
        %v506 = vshrl.u32 %v505, 7
        %v507 = vadd.s32 %v506, 8
        %v508 = vadd.s32 %v506, 16
        %v509 = vadd.s32 %v506, 24
        %v510 = vadd.s32 %v506, 32
        %v511 = vadd.s32 %v506, 40
        %v512 = vadd.s32 %v506, 48
        %v513 = vadd.s32 %v506, 56
        %v514 = vadd.s32 %v506, 64
        %v515 = vadd.s32 %v506, 72
        %v516 = vadd.s32 %v506, 80
        %v517 = vadd.s32 %v506, 88
        %v518 = vadd.s32 %v506, 96
        %v519 = vadd.s32 %v506, 104
        %v520 = vadd.s32 %v506, 112
        %v521 = vadd.s32 %v506, 120
        %v522 = vlaneseq
        %v523 = vand.u32 %v522, 127
        %v524 = vsub.s32 %v506, 2
        %v525 = vsub.s32 %v507, 2
        %v526 = vsub.s32 %v508, 2
        %v527 = vsub.s32 %v509, 2
        %v528 = vsub.s32 %v510, 2
        %v529 = vsub.s32 %v511, 2
        %v530 = vsub.s32 %v512, 2
        %v531 = vsub.s32 %v513, 2
        %v532 = vsub.s32 %v514, 2
        %v533 = vsub.s32 %v515, 2
        %v534 = vsub.s32 %v516, 2
        %v535 = vsub.s32 %v517, 2
        %v536 = vsub.s32 %v518, 2
        %v537 = vsub.s32 %v519, 2
        %v538 = vsub.s32 %v520, 2
        %v539 = vsub.s32 %v521, 2
        %vm540 = vcmp.gt.s32.totalorder %v524, 0
        %v541 = vsel %vm540, %v524, 0
        %vm542 = vcmp.gt.s32.totalorder %v525, 0
        %v543 = vsel %vm542, %v525, 0
        %vm544 = vcmp.gt.s32.totalorder %v526, 0
        %v545 = vsel %vm544, %v526, 0
        %vm546 = vcmp.gt.s32.totalorder %v527, 0
        %v547 = vsel %vm546, %v527, 0
        %vm548 = vcmp.gt.s32.totalorder %v528, 0
        %v549 = vsel %vm548, %v528, 0
        %vm550 = vcmp.gt.s32.totalorder %v529, 0
        %v551 = vsel %vm550, %v529, 0
        %vm552 = vcmp.gt.s32.totalorder %v530, 0
        %v553 = vsel %vm552, %v530, 0
        %vm554 = vcmp.gt.s32.totalorder %v531, 0
        %v555 = vsel %vm554, %v531, 0
        %vm556 = vcmp.gt.s32.totalorder %v532, 0
        %v557 = vsel %vm556, %v532, 0
        %vm558 = vcmp.gt.s32.totalorder %v533, 0
        %v559 = vsel %vm558, %v533, 0
        %vm560 = vcmp.gt.s32.totalorder %v534, 0
        %v561 = vsel %vm560, %v534, 0
        %vm562 = vcmp.gt.s32.totalorder %v535, 0
        %v563 = vsel %vm562, %v535, 0
        %vm564 = vcmp.gt.s32.totalorder %v536, 0
        %v565 = vsel %vm564, %v536, 0
        %vm566 = vcmp.gt.s32.totalorder %v537, 0
        %v567 = vsel %vm566, %v537, 0
        %vm568 = vcmp.gt.s32.totalorder %v538, 0
        %v569 = vsel %vm568, %v538, 0
        %vm570 = vcmp.gt.s32.totalorder %v539, 0
        %v571 = vsel %vm570, %v539, 0
        %v572 = vadd.s32 %v506, 3
        %v573 = vadd.s32 %v507, 3
        %v574 = vadd.s32 %v508, 3
        %v575 = vadd.s32 %v509, 3
        %v576 = vadd.s32 %v510, 3
        %v577 = vadd.s32 %v511, 3
        %v578 = vadd.s32 %v512, 3
        %v579 = vadd.s32 %v513, 3
        %v580 = vadd.s32 %v514, 3
        %v581 = vadd.s32 %v515, 3
        %v582 = vadd.s32 %v516, 3
        %v583 = vadd.s32 %v517, 3
        %v584 = vadd.s32 %v518, 3
        %v585 = vadd.s32 %v519, 3
        %v586 = vadd.s32 %v520, 3
        %v587 = vadd.s32 %v521, 3
        %s588 = ssub.s32 %s182, 1
        %v589 = vstv %s588
        %vm590 = vcmp.lt.s32.totalorder %v572, %v589
        %v591 = vsel %vm590, %v572, %v589
        %vm592 = vcmp.lt.s32.totalorder %v573, %v589
        %v593 = vsel %vm592, %v573, %v589
        %vm594 = vcmp.lt.s32.totalorder %v574, %v589
        %v595 = vsel %vm594, %v574, %v589
        %vm596 = vcmp.lt.s32.totalorder %v575, %v589
        %v597 = vsel %vm596, %v575, %v589
        %vm598 = vcmp.lt.s32.totalorder %v576, %v589
        %v599 = vsel %vm598, %v576, %v589
        %vm600 = vcmp.lt.s32.totalorder %v577, %v589
        %v601 = vsel %vm600, %v577, %v589
        %vm602 = vcmp.lt.s32.totalorder %v578, %v589
        %v603 = vsel %vm602, %v578, %v589
        %vm604 = vcmp.lt.s32.totalorder %v579, %v589
        %v605 = vsel %vm604, %v579, %v589
        %vm606 = vcmp.lt.s32.totalorder %v580, %v589
        %v607 = vsel %vm606, %v580, %v589
        %vm608 = vcmp.lt.s32.totalorder %v581, %v589
        %v609 = vsel %vm608, %v581, %v589
        %vm610 = vcmp.lt.s32.totalorder %v582, %v589
        %v611 = vsel %vm610, %v582, %v589
        %vm612 = vcmp.lt.s32.totalorder %v583, %v589
        %v613 = vsel %vm612, %v583, %v589
        %vm614 = vcmp.lt.s32.totalorder %v584, %v589
        %v615 = vsel %vm614, %v584, %v589
        %vm616 = vcmp.lt.s32.totalorder %v585, %v589
        %v617 = vsel %vm616, %v585, %v589
        %vm618 = vcmp.lt.s32.totalorder %v586, %v589
        %v619 = vsel %vm618, %v586, %v589
        %vm620 = vcmp.lt.s32.totalorder %v587, %v589
        %v621 = vsel %vm620, %v587, %v589
        %vm622 = vcmp.ge.s32.totalorder %v523, %v541
        %vm623 = vcmp.ge.s32.totalorder %v523, %v543
        %vm624 = vcmp.ge.s32.totalorder %v523, %v545
        %vm625 = vcmp.ge.s32.totalorder %v523, %v547
        %vm626 = vcmp.ge.s32.totalorder %v523, %v549
        %vm627 = vcmp.ge.s32.totalorder %v523, %v551
        %vm628 = vcmp.ge.s32.totalorder %v523, %v553
        %vm629 = vcmp.ge.s32.totalorder %v523, %v555
        %vm630 = vcmp.ge.s32.totalorder %v523, %v557
        %vm631 = vcmp.ge.s32.totalorder %v523, %v559
        %vm632 = vcmp.ge.s32.totalorder %v523, %v561
        %vm633 = vcmp.ge.s32.totalorder %v523, %v563
        %vm634 = vcmp.ge.s32.totalorder %v523, %v565
        %vm635 = vcmp.ge.s32.totalorder %v523, %v567
        %vm636 = vcmp.ge.s32.totalorder %v523, %v569
        %vm637 = vcmp.ge.s32.totalorder %v523, %v571
        %vm638 = vcmp.le.s32.totalorder %v523, %v591
        %vm639 = vcmp.le.s32.totalorder %v523, %v593
        %vm640 = vcmp.le.s32.totalorder %v523, %v595
        %vm641 = vcmp.le.s32.totalorder %v523, %v597
        %vm642 = vcmp.le.s32.totalorder %v523, %v599
        %vm643 = vcmp.le.s32.totalorder %v523, %v601
        %vm644 = vcmp.le.s32.totalorder %v523, %v603
        %vm645 = vcmp.le.s32.totalorder %v523, %v605
        %vm646 = vcmp.le.s32.totalorder %v523, %v607
        %vm647 = vcmp.le.s32.totalorder %v523, %v609
        %vm648 = vcmp.le.s32.totalorder %v523, %v611
        %vm649 = vcmp.le.s32.totalorder %v523, %v613
        %vm650 = vcmp.le.s32.totalorder %v523, %v615
        %vm651 = vcmp.le.s32.totalorder %v523, %v617
        %vm652 = vcmp.le.s32.totalorder %v523, %v619
        %vm653 = vcmp.le.s32.totalorder %v523, %v621
        %vm654 = vmand %vm622, %vm638
        %vm655 = vmand %vm623, %vm639
        %vm656 = vmand %vm624, %vm640
        %vm657 = vmand %vm625, %vm641
        %vm658 = vmand %vm626, %vm642
        %vm659 = vmand %vm627, %vm643
        %vm660 = vmand %vm628, %vm644
        %vm661 = vmand %vm629, %vm645
        %vm662 = vmand %vm630, %vm646
        %vm663 = vmand %vm631, %vm647
        %vm664 = vmand %vm632, %vm648
        %vm665 = vmand %vm633, %vm649
        %vm666 = vmand %vm634, %vm650
        %vm667 = vmand %vm635, %vm651
        %vm668 = vmand %vm636, %vm652
        %vm669 = vmand %vm637, %vm653
        %v670 = vstv %s182
        %vm671 = vcmp.lt.s32.totalorder %v506, %v670
        %vm672 = vcmp.lt.s32.totalorder %v507, %v670
        %vm673 = vcmp.lt.s32.totalorder %v508, %v670
        %vm674 = vcmp.lt.s32.totalorder %v509, %v670
        %vm675 = vcmp.lt.s32.totalorder %v510, %v670
        %vm676 = vcmp.lt.s32.totalorder %v511, %v670
        %vm677 = vcmp.lt.s32.totalorder %v512, %v670
        %vm678 = vcmp.lt.s32.totalorder %v513, %v670
        %vm679 = vcmp.lt.s32.totalorder %v514, %v670
        %vm680 = vcmp.lt.s32.totalorder %v515, %v670
        %vm681 = vcmp.lt.s32.totalorder %v516, %v670
        %vm682 = vcmp.lt.s32.totalorder %v517, %v670
        %vm683 = vcmp.lt.s32.totalorder %v518, %v670
        %vm684 = vcmp.lt.s32.totalorder %v519, %v670
        %vm685 = vcmp.lt.s32.totalorder %v520, %v670
        %vm686 = vcmp.lt.s32.totalorder %v521, %v670
        %vm687 = vmand %vm654, %vm671
        %vm688 = vmand %vm655, %vm672
        %vm689 = vmand %vm656, %vm673
        %vm690 = vmand %vm657, %vm674
        %vm691 = vmand %vm658, %vm675
        %vm692 = vmand %vm659, %vm676
        %vm693 = vmand %vm660, %vm677
        %vm694 = vmand %vm661, %vm678
        %vm695 = vmand %vm662, %vm679
        %vm696 = vmand %vm663, %vm680
        %vm697 = vmand %vm664, %vm681
        %vm698 = vmand %vm665, %vm682
        %vm699 = vmand %vm666, %vm683
        %vm700 = vmand %vm667, %vm684
        %vm701 = vmand %vm668, %vm685
        %vm702 = vmand %vm669, %vm686
        %v703 = vsel %vm687, %v427, -1e+09
        %v704 = vsel %vm688, %v432, -1e+09
        %v705 = vsel %vm689, %v437, -1e+09
        %v706 = vsel %vm690, %v442, -1e+09
        %v707 = vsel %vm691, %v447, -1e+09
        %v708 = vsel %vm692, %v452, -1e+09
        %v709 = vsel %vm693, %v457, -1e+09
        %v710 = vsel %vm694, %v462, -1e+09
        %v711 = vsel %vm695, %v467, -1e+09
        %v712 = vsel %vm696, %v472, -1e+09
        %v713 = vsel %vm697, %v477, -1e+09
        %v714 = vsel %vm698, %v482, -1e+09
        %v715 = vsel %vm699, %v487, -1e+09
        %v716 = vsel %vm700, %v492, -1e+09
        %v717 = vsel %vm701, %v497, -1e+09
        %v718 = vsel %vm702, %v502, -1e+09
        %719 = vmax.xlane.f32.xlu0 %v703
        %v720 = vpop.xlane.xlu0 %719
        %721 = vmax.xlane.f32.xlu0 %v704
        %v722 = vpop.xlane.xlu0 %721
        %723 = vmax.xlane.f32.xlu0 %v705
        %v724 = vpop.xlane.xlu0 %723
        %725 = vmax.xlane.f32.xlu0 %v706
        %v726 = vpop.xlane.xlu0 %725
        %727 = vmax.xlane.f32.xlu0 %v707
        %v728 = vpop.xlane.xlu0 %727
        %729 = vmax.xlane.f32.xlu0 %v708
        %v730 = vpop.xlane.xlu0 %729
        %731 = vmax.xlane.f32.xlu0 %v709
        %v732 = vpop.xlane.xlu0 %731
        %733 = vmax.xlane.f32.xlu0 %v710
        %v734 = vpop.xlane.xlu0 %733
        %735 = vmax.xlane.f32.xlu0 %v711
        %v736 = vpop.xlane.xlu0 %735
        %737 = vmax.xlane.f32.xlu0 %v712
        %v738 = vpop.xlane.xlu0 %737
        %739 = vmax.xlane.f32.xlu0 %v713
        %v740 = vpop.xlane.xlu0 %739
        %741 = vmax.xlane.f32.xlu0 %v714
        %v742 = vpop.xlane.xlu0 %741
        %743 = vmax.xlane.f32.xlu0 %v715
        %v744 = vpop.xlane.xlu0 %743
        %745 = vmax.xlane.f32.xlu0 %v716
        %v746 = vpop.xlane.xlu0 %745
        %747 = vmax.xlane.f32.xlu0 %v717
        %v748 = vpop.xlane.xlu0 %747
        %749 = vmax.xlane.f32.xlu0 %v718
        %v750 = vpop.xlane.xlu0 %749
        %v751 = vsub.f32 %v703, %v720
        %v752 = vsub.f32 %v704, %v722
        %v753 = vsub.f32 %v705, %v724
        %v754 = vsub.f32 %v706, %v726
        %v755 = vsub.f32 %v707, %v728
        %v756 = vsub.f32 %v708, %v730
        %v757 = vsub.f32 %v709, %v732
        %v758 = vsub.f32 %v710, %v734
        %v759 = vsub.f32 %v711, %v736
        %v760 = vsub.f32 %v712, %v738
        %v761 = vsub.f32 %v713, %v740
        %v762 = vsub.f32 %v714, %v742
        %v763 = vsub.f32 %v715, %v744
        %v764 = vsub.f32 %v716, %v746
        %v765 = vsub.f32 %v717, %v748
        %v766 = vsub.f32 %v718, %v750
        %v767 = vmul.f32 %v751, 1.442695
        %v768 = vpow.pop %v767
        %v769 = vmul.f32 %v752, 1.442695
        %v770 = vpow.pop %v769
        %v771 = vmul.f32 %v753, 1.442695
        %v772 = vpow.pop %v771
        %v773 = vmul.f32 %v754, 1.442695
        %v774 = vpow.pop %v773
        %v775 = vmul.f32 %v755, 1.442695
        %v776 = vpow.pop %v775
        %v777 = vmul.f32 %v756, 1.442695
        %v778 = vpow.pop %v777
        %v779 = vmul.f32 %v757, 1.442695
        %v780 = vpow.pop %v779
        %v781 = vmul.f32 %v758, 1.442695
        %v782 = vpow.pop %v781
        %v783 = vmul.f32 %v759, 1.442695
        %v784 = vpow.pop %v783
        %v785 = vmul.f32 %v760, 1.442695
        %v786 = vpow.pop %v785
        %v787 = vmul.f32 %v761, 1.442695
        %v788 = vpow.pop %v787
        %v789 = vmul.f32 %v762, 1.442695
        %v790 = vpow.pop %v789
        %v791 = vmul.f32 %v763, 1.442695
        %v792 = vpow.pop %v791
        %v793 = vmul.f32 %v764, 1.442695
        %v794 = vpow.pop %v793
        %v795 = vmul.f32 %v765, 1.442695
        %v796 = vpow.pop %v795
        %v797 = vmul.f32 %v766, 1.442695
        %v798 = vpow.pop %v797
        %v799 = vsel %vm687, 1, 0
        %v800 = vsel %vm688, 1, 0
        %v801 = vsel %vm689, 1, 0
        %v802 = vsel %vm690, 1, 0
        %v803 = vsel %vm691, 1, 0
        %v804 = vsel %vm692, 1, 0
        %v805 = vsel %vm693, 1, 0
        %v806 = vsel %vm694, 1, 0
        %v807 = vsel %vm695, 1, 0
        %v808 = vsel %vm696, 1, 0
        %v809 = vsel %vm697, 1, 0
        %v810 = vsel %vm698, 1, 0
        %v811 = vsel %vm699, 1, 0
        %v812 = vsel %vm700, 1, 0
        %v813 = vsel %vm701, 1, 0
        %v814 = vsel %vm702, 1, 0
        %v815 = vcvt.s32.f32 %v799
        %v816 = vcvt.s32.f32 %v800
        %v817 = vcvt.s32.f32 %v801
        %v818 = vcvt.s32.f32 %v802
        %v819 = vcvt.s32.f32 %v803
        %v820 = vcvt.s32.f32 %v804
        %v821 = vcvt.s32.f32 %v805
        %v822 = vcvt.s32.f32 %v806
        %v823 = vcvt.s32.f32 %v807
        %v824 = vcvt.s32.f32 %v808
        %v825 = vcvt.s32.f32 %v809
        %v826 = vcvt.s32.f32 %v810
        %v827 = vcvt.s32.f32 %v811
        %v828 = vcvt.s32.f32 %v812
        %v829 = vcvt.s32.f32 %v813
        %v830 = vcvt.s32.f32 %v814
        %v831 = vmul.f32 %v768, %v815
        %v832 = vmul.f32 %v770, %v816
        %v833 = vmul.f32 %v772, %v817
        %v834 = vmul.f32 %v774, %v818
        %v835 = vmul.f32 %v776, %v819
        %v836 = vmul.f32 %v778, %v820
        %v837 = vmul.f32 %v780, %v821
        %v838 = vmul.f32 %v782, %v822
        %v839 = vmul.f32 %v784, %v823
        %v840 = vmul.f32 %v786, %v824
        %v841 = vmul.f32 %v788, %v825
        %v842 = vmul.f32 %v790, %v826
        %v843 = vmul.f32 %v792, %v827
        %v844 = vmul.f32 %v794, %v828
        %v845 = vmul.f32 %v796, %v829
        %v846 = vmul.f32 %v798, %v830
        %847 = vadd.xlane.f32.xlu0 %v831
        %v848 = vpop.xlane.xlu0 %847
        %849 = vadd.xlane.f32.xlu0 %v832
        %v850 = vpop.xlane.xlu0 %849
        %851 = vadd.xlane.f32.xlu0 %v833
        %v852 = vpop.xlane.xlu0 %851
        %853 = vadd.xlane.f32.xlu0 %v834
        %v854 = vpop.xlane.xlu0 %853
        %855 = vadd.xlane.f32.xlu0 %v835
        %v856 = vpop.xlane.xlu0 %855
        %857 = vadd.xlane.f32.xlu0 %v836
        %v858 = vpop.xlane.xlu0 %857
        %859 = vadd.xlane.f32.xlu0 %v837
        %v860 = vpop.xlane.xlu0 %859
        %861 = vadd.xlane.f32.xlu0 %v838
        %v862 = vpop.xlane.xlu0 %861
        %863 = vadd.xlane.f32.xlu0 %v839
        %v864 = vpop.xlane.xlu0 %863
        %865 = vadd.xlane.f32.xlu0 %v840
        %v866 = vpop.xlane.xlu0 %865
        %867 = vadd.xlane.f32.xlu0 %v841
        %v868 = vpop.xlane.xlu0 %867
        %869 = vadd.xlane.f32.xlu0 %v842
        %v870 = vpop.xlane.xlu0 %869
        %871 = vadd.xlane.f32.xlu0 %v843
        %v872 = vpop.xlane.xlu0 %871
        %873 = vadd.xlane.f32.xlu0 %v844
        %v874 = vpop.xlane.xlu0 %873
        %875 = vadd.xlane.f32.xlu0 %v845
        %v876 = vpop.xlane.xlu0 %875
        %877 = vadd.xlane.f32.xlu0 %v846
        %v878 = vpop.xlane.xlu0 %877
        %vm879 = vcmp.gt.f32.partialorder %v848, 0.0
        %vm880 = vcmp.gt.f32.partialorder %v850, 0.0
        %vm881 = vcmp.gt.f32.partialorder %v852, 0.0
        %vm882 = vcmp.gt.f32.partialorder %v854, 0.0
        %vm883 = vcmp.gt.f32.partialorder %v856, 0.0
        %vm884 = vcmp.gt.f32.partialorder %v858, 0.0
        %vm885 = vcmp.gt.f32.partialorder %v860, 0.0
        %vm886 = vcmp.gt.f32.partialorder %v862, 0.0
        %vm887 = vcmp.gt.f32.partialorder %v864, 0.0
        %vm888 = vcmp.gt.f32.partialorder %v866, 0.0
        %vm889 = vcmp.gt.f32.partialorder %v868, 0.0
        %vm890 = vcmp.gt.f32.partialorder %v870, 0.0
        %vm891 = vcmp.gt.f32.partialorder %v872, 0.0
        %vm892 = vcmp.gt.f32.partialorder %v874, 0.0
        %vm893 = vcmp.gt.f32.partialorder %v876, 0.0
        %vm894 = vcmp.gt.f32.partialorder %v878, 0.0
        %v895 = vsel %vm879, %v848, 1.0
        %v896 = vsel %vm880, %v850, 1.0
        %v897 = vsel %vm881, %v852, 1.0
        %v898 = vsel %vm882, %v854, 1.0
        %v899 = vsel %vm883, %v856, 1.0
        %v900 = vsel %vm884, %v858, 1.0
        %v901 = vsel %vm885, %v860, 1.0
        %v902 = vsel %vm886, %v862, 1.0
        %v903 = vsel %vm887, %v864, 1.0
        %v904 = vsel %vm888, %v866, 1.0
        %v905 = vsel %vm889, %v868, 1.0
        %v906 = vsel %vm890, %v870, 1.0
        %v907 = vsel %vm891, %v872, 1.0
        %v908 = vsel %vm892, %v874, 1.0
        %v909 = vsel %vm893, %v876, 1.0
        %v910 = vsel %vm894, %v878, 1.0
        %v911 = vrcp.pop %v895
        %v912 = vrcp.pop %v896
        %v913 = vrcp.pop %v897
        %v914 = vrcp.pop %v898
        %v915 = vrcp.pop %v899
        %v916 = vrcp.pop %v900
        %v917 = vrcp.pop %v901
        %v918 = vrcp.pop %v902
        %v919 = vrcp.pop %v903
        %v920 = vrcp.pop %v904
        %v921 = vrcp.pop %v905
        %v922 = vrcp.pop %v906
        %v923 = vrcp.pop %v907
        %v924 = vrcp.pop %v908
        %v925 = vrcp.pop %v909
        %v926 = vrcp.pop %v910
        %v927 = vmul.f32 %v831, %v911
        %v928 = vmul.f32 %v832, %v912
        %v929 = vmul.f32 %v833, %v913
        %v930 = vmul.f32 %v834, %v914
        %v931 = vmul.f32 %v835, %v915
        %v932 = vmul.f32 %v836, %v916
        %v933 = vmul.f32 %v837, %v917
        %v934 = vmul.f32 %v838, %v918
        %v935 = vmul.f32 %v839, %v919
        %v936 = vmul.f32 %v840, %v920
        %v937 = vmul.f32 %v841, %v921
        %v938 = vmul.f32 %v842, %v922
        %v939 = vmul.f32 %v843, %v923
        %v940 = vmul.f32 %v844, %v924
        %v941 = vmul.f32 %v845, %v925
        %v942 = vmul.f32 %v846, %v926
        %943 = vst [vmem:[%s181] sm:$0xff] %v927
        %944 = vst [vmem:[%s181 + $0x8] sm:$0xff] %v928
        %945 = vst [vmem:[%s181 + $0x10] sm:$0xff] %v929
        %946 = vst [vmem:[%s181 + $0x18] sm:$0xff] %v930
        %947 = vst [vmem:[%s181 + $0x20] sm:$0xff] %v931
        %948 = vst [vmem:[%s181 + $0x28] sm:$0xff] %v932
        %949 = vst [vmem:[%s181 + $0x30] sm:$0xff] %v933
        %950 = vst [vmem:[%s181 + $0x38] sm:$0xff] %v934
        %951 = vst [vmem:[%s181 + $0x40] sm:$0xff] %v935
        %952 = vst [vmem:[%s181 + $0x48] sm:$0xff] %v936
        %953 = vst [vmem:[%s181 + $0x50] sm:$0xff] %v937
        %954 = vst [vmem:[%s181 + $0x58] sm:$0xff] %v938
        %955 = vst [vmem:[%s181 + $0x60] sm:$0xff] %v939
        %956 = vst [vmem:[%s181 + $0x68] sm:$0xff] %v940
        %957 = vst [vmem:[%s181 + $0x70] sm:$0xff] %v941
        %958 = vst [vmem:[%s181 + $0x78] sm:$0xff] %v942
        %s959 = sand.u32 %s80, 1
        %s960 = scalar_lea.sflag [#allocation6], %s959
        %s961 = sand.u32 %s80, 1
        %s962 = smul.addr %s961, 128
        %s963 = scalar_lea.vmem [#allocation9], %s962
        // Predicated region
        $region37: #{tpu_custom_call.1} parent=27 // pred_check
          %p964 = pneg %p90
        $region38: #{tpu_custom_call.1} parent=27 // pred_check_branch
          %966 = sbr.rel (%p964) target = $region40
        $region39: #{tpu_custom_call.1} parent=27 // pred_region
          %s968 = ssub.s32 2048, 2048
          %969 = vsyncadd %s960, %s968
          %s970 = smul.addr %s25, 16
          %s971 = smul.addr %s970, 128
          %s972 = scalar_lea.hbm %s3, %s971
          %s973 = sshll.u32 %s963, 4
          %s974 = int_to_ptr.vmem [resolvable:$true] %s973
          %979 = dma.vmem_to_hbm [thread:$0]  %s974, 2048, %s972, %s960, 128, 128, 8
        $region40: #{tpu_custom_call.1} parent=27 // pred_fallthru
          _
      $region28: #{tpu_custom_call.1} parent=5 // pred_fallthru
        _
      %p980 = scmp.le.s32.totalorder 2, %s20
      // Predicated region
      $region41: #{tpu_custom_call.1} parent=5 // pred_check
        %p981 = pneg %p980
      $region42: #{tpu_custom_call.1} parent=5 // pred_check_branch
        %983 = sbr.rel (%p981) target = $region44
      $region43: #{tpu_custom_call.1} parent=5 // pred_region
        %s984 = ssub.s32 %s20, 2
        // Predicated region
        $region45: #{tpu_custom_call.1} parent=43 // pred_check
          %p985 = pneg %p96
        $region46: #{tpu_custom_call.1} parent=43 // pred_check_branch
          %987 = sbr.rel (%p985) target = $region48
        $region47: #{tpu_custom_call.1} parent=43 // pred_region
          %s988 = sand.u32 %s81, 1
          %s989 = scalar_lea.sflag [#allocation6], %s988
          %s990 = sand.u32 %s81, 1
          %s991 = smul.addr %s990, 128
          %s992 = scalar_lea.vmem [#allocation9], %s991
          %993 = dma.done %s989, 2048
        $region48: #{tpu_custom_call.1} parent=43 // pred_fallthru
          _
      $region44: #{tpu_custom_call.1} parent=5 // pred_fallthru
        _
    $region6: #{tpu_custom_call.1} parent=1 // loop_footer
      %s24 = sadd.s32 1, %s20
    $region7: #{tpu_custom_call.1} parent=1 // loop_footer_branch
      %19 = sbr.rel target = $region3
    $region8: #{tpu_custom_call.1} parent=1 // loop_exit
      _
    %994 = vsyncpa [#allocation5], 1
    %s995 = scalar_lea.sflag [#allocation5], 1
    %996 = vsyncpa %s995, 1
    %997 = vsyncpa [#allocation8], 1
    %998 = vsyncpa [#allocation6], 1
    %s999 = scalar_lea.sflag [#allocation6], 1
    %1000 = vsyncpa %s999, 1

</llo_original>
